<compile_context>
chip_gen: v6e
topology: v6e:2x2x1
jax: 0.10.0
libtpu: 0.0.40
codegen_flags: <defaults>
</compile_context>

<pallas_src>
import functools

import jax
import jax.numpy as jnp
import numpy as np
from jax.experimental import pallas as pl
from jax.experimental.pallas import tpu as pltpu


def _round_up(x, m):
    return (x + m - 1) // m * m


def _siamese_mlp_kernel(x_ref, w1_ref, b1_ref, w2_ref, b2_ref, o_ref):
    """Single fused step: both Siamese branches stacked on the row (M) axis.

    x_ref : (M_pad, D)        both branches' flattened batches (rows padded to 8)
    w1_ref: (D, HIDDEN)       shared layer-1 weights
    b1_ref: (1, HIDDEN)       shared layer-1 bias
    w2_ref: (HIDDEN, E_pad)   shared layer-2 weights (zero-padded to lane-dense N)
    b2_ref: (1, E_pad)        shared layer-2 bias   (zero-padded)
    o_ref : (M_pad, E_pad)    both branches' embeddings (lane-dense stores)
    """
    x = x_ref[...]
    h = jnp.dot(x, w1_ref[...], preferred_element_type=jnp.float32) + b1_ref[...]
    h = jnp.maximum(h, 0.0)  # ReLU (f32 on the VPU path — v5e-safe)
    y = jnp.dot(h, w2_ref[...], preferred_element_type=jnp.float32) + b2_ref[...]
    o_ref[...] = y.astype(o_ref.dtype)


@jax.jit
def siamese_forward(x1, x2, w1, b1, w2, b2):
    """SiameseNet.forward: returns (embedding(x1), embedding(x2)) with shared weights."""
    assert x1.shape == x2.shape and x1.dtype == x2.dtype
    B = x1.shape[0]
    D = int(np.prod(x1.shape[1:]))
    HIDDEN = w1.shape[1]
    E = w2.shape[1]

    # Fold the Siamese pair into the batch: (2B, D).  Pad rows to full f32
    # sublanes and the output N to full 128 lanes (padding is zeros, sliced
    # off below, so semantics are unchanged).
    M = 2 * B
    M_pad = max(_round_up(M, 8), 8)
    E_pad = _round_up(E, 128)

    xs = jnp.concatenate([x1.reshape(B, D), x2.reshape(B, D)], axis=0)  # (2B, D)
    if M_pad != M:
        xs = jnp.pad(xs, ((0, M_pad - M), (0, 0)))

    w2p = jnp.pad(w2, ((0, 0), (0, E_pad - E))) if E_pad != E else w2
    b2p = jnp.pad(b2, ((0, E_pad - E),)) if E_pad != E else b2
    b1_2d = b1.reshape(1, HIDDEN)
    b2_2d = b2p.reshape(1, E_pad)

    out = pl.pallas_call(
        _siamese_mlp_kernel,
        out_shape=jax.ShapeDtypeStruct((M_pad, E_pad), x1.dtype),
        grid=(1,),  # single step: whole fused problem fits comfortably in VMEM
        in_specs=[
            pl.BlockSpec((M_pad, D), lambda i: (0, 0)),       # x: both branches, fused rows
            pl.BlockSpec((D, HIDDEN), lambda i: (0, 0)),      # W1: shared
            pl.BlockSpec((1, HIDDEN), lambda i: (0, 0)),      # b1: shared
            pl.BlockSpec((HIDDEN, E_pad), lambda i: (0, 0)),  # W2: shared, lane-dense N
            pl.BlockSpec((1, E_pad), lambda i: (0, 0)),       # b2: shared, lane-dense N
        ],
        out_specs=pl.BlockSpec((M_pad, E_pad), lambda i: (0, 0)),
        compiler_params=pltpu.CompilerParams(
            dimension_semantics=("arbitrary",)
        ),
    )(xs, w1, b1_2d, w2p, b2_2d)

    out1 = out[:B, :E]
    out2 = out[B:2 * B, :E]
    return out1, out2


def _reference_forward(x1, x2, w1, b1, w2, b2):
    """Pure-JAX reference of the same Siamese MLP (for correctness check)."""
    def embed(x):
        B = x.shape[0]
        xf = x.reshape(B, -1).astype(jnp.float32)
        h = jnp.maximum(xf @ w1.astype(jnp.float32) + b1, 0.0)
        return h @ w2.astype(jnp.float32) + b2
    return embed(x1), embed(x2)


if __name__ == "__main__":
    # Small shapes consistent with an NCHW conv-style input.
    B, C, H, W = 2, 4, 16, 16
    D = C * H * W          # 1024
    HIDDEN = 128
    EMBED = 32
    dtype = jnp.float32

    key = jax.random.PRNGKey(0)
    k_x1, k_x2, k_w1, k_b1, k_w2, k_b2 = jax.random.split(key, 6)

    x1 = jax.random.normal(k_x1, (B, C, H, W), dtype=dtype)
    x2 = jax.random.normal(k_x2, (B, C, H, W), dtype=dtype)

    # Deterministic synthetic embedding-net parameters (shared across branches).
    w1 = (jax.random.normal(k_w1, (D, HIDDEN), dtype=dtype) / np.sqrt(D)).astype(dtype)
    b1 = (jax.random.normal(k_b1, (HIDDEN,), dtype=dtype) * 0.01).astype(dtype)
    w2 = (jax.random.normal(k_w2, (HIDDEN, EMBED), dtype=dtype) / np.sqrt(HIDDEN)).astype(dtype)
    b2 = (jax.random.normal(k_b2, (EMBED,), dtype=dtype) * 0.01).astype(dtype)

    out1, out2 = siamese_forward(x1, x2, w1, b1, w2, b2)
    jax.block_until_ready((out1, out2))

    ref1, ref2 = _reference_forward(x1, x2, w1, b1, w2, b2)
    np.testing.assert_allclose(np.asarray(out1), np.asarray(ref1), rtol=1e-5, atol=1e-5)
    np.testing.assert_allclose(np.asarray(out2), np.asarray(ref2), rtol=1e-5, atol=1e-5)
    assert out1.shape == (B, EMBED) and out2.shape == (B, EMBED)

    print("KERNEL_OK")
</pallas_src>

<mosaic_0001>
module attributes {stable_mosaic.version = 11 : i64} {
  func.func @_siamese_mlp_kernel(%arg0: i32, %arg1: memref<8x1024xf32, #tpu.memory_space<vmem>>, %arg2: memref<1024x128xf32, #tpu.memory_space<vmem>>, %arg3: memref<1x128xf32, #tpu.memory_space<vmem>>, %arg4: memref<128x128xf32, #tpu.memory_space<vmem>>, %arg5: memref<1x128xf32, #tpu.memory_space<vmem>>, %arg6: memref<8x128xf32, #tpu.memory_space<vmem>>) attributes {dimension_semantics = [#tpu.dimension_semantics<arbitrary>], iteration_bounds = array<i64: 1>, scalar_prefetch = 0 : i64, scratch_operands = 0 : i64, tpu.core_type = #tpu.core_type<tc>, window_params = [{pipeline_mode = #tpu.pipeline_mode<synchronous>, transform_indices = @transform_0, window_bounds = array<i64: 8, 1024>}, {pipeline_mode = #tpu.pipeline_mode<synchronous>, transform_indices = @transform_1, window_bounds = array<i64: 1024, 128>}, {pipeline_mode = #tpu.pipeline_mode<synchronous>, transform_indices = @transform_2, window_bounds = array<i64: 1, 128>}, {pipeline_mode = #tpu.pipeline_mode<synchronous>, transform_indices = @transform_3, window_bounds = array<i64: 128, 128>}, {pipeline_mode = #tpu.pipeline_mode<synchronous>, transform_indices = @transform_4, window_bounds = array<i64: 1, 128>}, {pipeline_mode = #tpu.pipeline_mode<synchronous>, transform_indices = @transform_5, window_bounds = array<i64: 8, 128>}]} {
    %c0 = arith.constant 0 : index
    %c0_0 = arith.constant 0 : index
    %0 = vector.load %arg1[%c0, %c0_0] : memref<8x1024xf32, #tpu.memory_space<vmem>>, vector<8x1024xf32>
    %c0_1 = arith.constant 0 : index
    %c0_2 = arith.constant 0 : index
    %1 = vector.load %arg2[%c0_1, %c0_2] : memref<1024x128xf32, #tpu.memory_space<vmem>>, vector<1024x128xf32>
    %cst = arith.constant dense<0.000000e+00> : vector<8x128xf32>
    %2 = tpu.matmul %0, %1, %cst {dimension_numbers = #tpu.dot_dimension_numbers<[1], [0], [0], [1], [0, 0, 1, 1], [], []>} : vector<8x1024xf32>, vector<1024x128xf32>, vector<8x128xf32> -> vector<8x128xf32>
    %c0_3 = arith.constant 0 : index
    %c0_4 = arith.constant 0 : index
    %3 = vector.load %arg3[%c0_3, %c0_4] : memref<1x128xf32, #tpu.memory_space<vmem>>, vector<1x128xf32>
    %4 = vector.broadcast %3 : vector<1x128xf32> to vector<8x128xf32>
    %5 = arith.addf %2, %4 : vector<8x128xf32>
    %cst_5 = arith.constant 0.000000e+00 : f32
    %6 = vector.broadcast %cst_5 : f32 to vector<8x128xf32>
    %7 = arith.maximumf %5, %6 : vector<8x128xf32>
    %c0_6 = arith.constant 0 : index
    %c0_7 = arith.constant 0 : index
    %8 = vector.load %arg4[%c0_6, %c0_7] : memref<128x128xf32, #tpu.memory_space<vmem>>, vector<128x128xf32>
    %cst_8 = arith.constant dense<0.000000e+00> : vector<8x128xf32>
    %9 = tpu.matmul %7, %8, %cst_8 {dimension_numbers = #tpu.dot_dimension_numbers<[1], [0], [0], [1], [0, 0, 1, 1], [], []>} : vector<8x128xf32>, vector<128x128xf32>, vector<8x128xf32> -> vector<8x128xf32>
    %c0_9 = arith.constant 0 : index
    %c0_10 = arith.constant 0 : index
    %10 = vector.load %arg5[%c0_9, %c0_10] : memref<1x128xf32, #tpu.memory_space<vmem>>, vector<1x128xf32>
    %11 = vector.broadcast %10 : vector<1x128xf32> to vector<8x128xf32>
    %12 = arith.addf %9, %11 : vector<8x128xf32>
    %c0_11 = arith.constant 0 : index
    %c0_12 = arith.constant 0 : index
    %13 = vector.load %arg6[%c0_11, %c0_12] : memref<8x128xf32, #tpu.memory_space<vmem>>, vector<8x128xf32>
    tpu.vector_store %arg6[%c0_11, %c0_12], %12 {strides = array<i32>} : memref<8x128xf32, #tpu.memory_space<vmem>>, vector<8x128xf32>,
    return
  }
  func.func @transform_0(%arg0: i32) -> (i32, i32) {
    %c0_i32 = arith.constant 0 : i32
    %c0_i32_0 = arith.constant 0 : i32
    %c0_i32_1 = arith.constant 0 : i32
    return %c0_i32, %c0_i32_0 : i32, i32
  }
  func.func @transform_1(%arg0: i32) -> (i32, i32) {
    %c0_i32 = arith.constant 0 : i32
    %c0_i32_0 = arith.constant 0 : i32
    %c0_i32_1 = arith.constant 0 : i32
    return %c0_i32, %c0_i32_0 : i32, i32
  }
  func.func @transform_2(%arg0: i32) -> (i32, i32) {
    %c0_i32 = arith.constant 0 : i32
    %c0_i32_0 = arith.constant 0 : i32
    %c0_i32_1 = arith.constant 0 : i32
    return %c0_i32, %c0_i32_0 : i32, i32
  }
  func.func @transform_3(%arg0: i32) -> (i32, i32) {
    %c0_i32 = arith.constant 0 : i32
    %c0_i32_0 = arith.constant 0 : i32
    %c0_i32_1 = arith.constant 0 : i32
    return %c0_i32, %c0_i32_0 : i32, i32
  }
  func.func @transform_4(%arg0: i32) -> (i32, i32) {
    %c0_i32 = arith.constant 0 : i32
    %c0_i32_0 = arith.constant 0 : i32
    %c0_i32_1 = arith.constant 0 : i32
    return %c0_i32, %c0_i32_0 : i32, i32
  }
  func.func @transform_5(%arg0: i32) -> (i32, i32) {
    %c0_i32 = arith.constant 0 : i32
    %c0_i32_0 = arith.constant 0 : i32
    %c0_i32_1 = arith.constant 0 : i32
    return %c0_i32, %c0_i32_0 : i32, i32
  }
}

</mosaic_0001>

<llo_original>
// kernel: siamese_forward.1
$region0: #{siamese_forward.1}
  #allocation0 [shape = 'u32[]', space=smem, size = 0x4, offset = 0x4, fixed_abs, tag = 'smem constant byte address 0x4 - core index']
  #allocation1 [shape = 'u32[144,128]{1,0:T(1,128)}', space=vmem, size = 0x12000, scoped, tag = 'internal scratch']
  %s0 = inlined_call_operand.vmem [shape: f32[8,1024], index: 0, kind: input, shape index: {}]
  %s1 = inlined_call_operand.hbm [shape: f32[1024,128], index: 1, kind: input, shape index: {}]
  %s2 = inlined_call_operand.vmem [shape: f32[1,128], index: 2, kind: input, shape index: {}]
  %s3 = inlined_call_operand.vmem [shape: f32[128,128], index: 3, kind: input, shape index: {}]
  %s4 = inlined_call_operand.vmem [shape: f32[1,128], index: 4, kind: input, shape index: {}]
  %s5 = inlined_call_operand.vmem [shape: f32[8,128], index: 5, kind: output, shape index: {}]
  %s6 = sld [smem:[#allocation0]]
  $region34: #{siamese_forward.1} parent=0
    _
  %s8 = ssub.s32 1, %s6
  %s9 = scalar_select 0, %s8, %s6
  $region1: #{siamese_forward.1} parent=0
    #allocation2 [shape = 'u8[524288]{0}', space=vmem, size = 0x80000, scoped, tag = 'input window, operand 1, single buffered']
    #allocation3 [shape = 's32[1]{0}', space=sflag, size = 0x4, scoped, tag = 'scoped memory for siamese_forward.1']
    %10 = vsyncpa [#allocation3], 0
    // Predicated region
    $region2: #{siamese_forward.1} parent=1 // pred_check
      _
    $region3: #{siamese_forward.1} parent=1 // pred_check_branch
      %12 = sbr.rel (0) target = $region5
    $region4: #{siamese_forward.1} parent=1 // pred_region
      _
    $region5: #{siamese_forward.1} parent=1 // pred_fallthru
      _
    // Predicated region
    $region6: #{siamese_forward.1} parent=1 // pred_check
      _
    $region7: #{siamese_forward.1} parent=1 // pred_check_branch
      %14 = sbr.rel (0) target = $region9
    $region8: #{siamese_forward.1} parent=1 // pred_region
      %s16 = ssub.s32 16384, 16384
      %17 = vsyncadd [#allocation3], %s16
      %s18 = sshll.u32 [#allocation2], 4
      %s19 = int_to_ptr.vmem [resolvable:$true] %s18
      %24 = dma.hbm_to_vmem [thread:$0]  %s1, 16384, %s19, [#allocation3], 128, 128, 8
    $region9: #{siamese_forward.1} parent=1 // pred_fallthru
      _
    // Predicated region
    $region10: #{siamese_forward.1} parent=1 // pred_check
      _
    $region11: #{siamese_forward.1} parent=1 // pred_check_branch
      %26 = sbr.rel (0) target = $region13
    $region12: #{siamese_forward.1} parent=1 // pred_region
      _
    $region13: #{siamese_forward.1} parent=1 // pred_fallthru
      _
    // Predicated region
    $region14: #{siamese_forward.1} parent=1 // pred_check
      _
    $region15: #{siamese_forward.1} parent=1 // pred_check_branch
      %28 = sbr.rel (0) target = $region17
    $region16: #{siamese_forward.1} parent=1 // pred_region
      _
    $region17: #{siamese_forward.1} parent=1 // pred_fallthru
      _
    // Predicated region
    $region18: #{siamese_forward.1} parent=1 // pred_check
      _
    $region19: #{siamese_forward.1} parent=1 // pred_check_branch
      %30 = sbr.rel (0) target = $region21
    $region20: #{siamese_forward.1} parent=1 // pred_region
      _
    $region21: #{siamese_forward.1} parent=1 // pred_fallthru
      _
    // Predicated region
    $region22: #{siamese_forward.1} parent=1 // pred_check
      _
    $region23: #{siamese_forward.1} parent=1 // pred_check_branch
      %32 = sbr.rel (0) target = $region25
    $region24: #{siamese_forward.1} parent=1 // pred_region
      %33 = dma.done [#allocation3], 16384
    $region25: #{siamese_forward.1} parent=1 // pred_fallthru
      _
    %v34 = vld [vmem:[%s0] sm:$0xff]
    %v35 = vld [vmem:[%s0 + $0x8] sm:$0xff]
    %v36 = vld [vmem:[%s0 + $0x10] sm:$0xff]
    %v37 = vld [vmem:[%s0 + $0x18] sm:$0xff]
    %v38 = vld [vmem:[%s0 + $0x20] sm:$0xff]
    %v39 = vld [vmem:[%s0 + $0x28] sm:$0xff]
    %v40 = vld [vmem:[%s0 + $0x30] sm:$0xff]
    %v41 = vld [vmem:[%s0 + $0x38] sm:$0xff]
    %v42 = vld [vmem:[#allocation2] sm:$0xff]
    %v43 = vld [vmem:[#allocation2 + $0x8] sm:$0xff]
    %v44 = vld [vmem:[#allocation2 + $0x10] sm:$0xff]
    %v45 = vld [vmem:[#allocation2 + $0x18] sm:$0xff]
    %v46 = vld [vmem:[#allocation2 + $0x20] sm:$0xff]
    %v47 = vld [vmem:[#allocation2 + $0x28] sm:$0xff]
    %v48 = vld [vmem:[#allocation2 + $0x30] sm:$0xff]
    %v49 = vld [vmem:[#allocation2 + $0x38] sm:$0xff]
    %v50 = vld [vmem:[#allocation2 + $0x40] sm:$0xff]
    %v51 = vld [vmem:[#allocation2 + $0x48] sm:$0xff]
    %v52 = vld [vmem:[#allocation2 + $0x50] sm:$0xff]
    %v53 = vld [vmem:[#allocation2 + $0x58] sm:$0xff]
    %v54 = vld [vmem:[#allocation2 + $0x60] sm:$0xff]
    %v55 = vld [vmem:[#allocation2 + $0x68] sm:$0xff]
    %v56 = vld [vmem:[#allocation2 + $0x70] sm:$0xff]
    %v57 = vld [vmem:[#allocation2 + $0x78] sm:$0xff]
    %v58 = vld [vmem:[#allocation2 + $0x80] sm:$0xff]
    %v59 = vld [vmem:[#allocation2 + $0x88] sm:$0xff]
    %v60 = vld [vmem:[#allocation2 + $0x90] sm:$0xff]
    %v61 = vld [vmem:[#allocation2 + $0x98] sm:$0xff]
    %v62 = vld [vmem:[#allocation2 + $0xa0] sm:$0xff]
    %v63 = vld [vmem:[#allocation2 + $0xa8] sm:$0xff]
    %v64 = vld [vmem:[#allocation2 + $0xb0] sm:$0xff]
    %v65 = vld [vmem:[#allocation2 + $0xb8] sm:$0xff]
    %v66 = vld [vmem:[#allocation2 + $0xc0] sm:$0xff]
    %v67 = vld [vmem:[#allocation2 + $0xc8] sm:$0xff]
    %v68 = vld [vmem:[#allocation2 + $0xd0] sm:$0xff]
    %v69 = vld [vmem:[#allocation2 + $0xd8] sm:$0xff]
    %v70 = vld [vmem:[#allocation2 + $0xe0] sm:$0xff]
    %v71 = vld [vmem:[#allocation2 + $0xe8] sm:$0xff]
    %v72 = vld [vmem:[#allocation2 + $0xf0] sm:$0xff]
    %v73 = vld [vmem:[#allocation2 + $0xf8] sm:$0xff]
    %v74 = vld [vmem:[#allocation2 + $0x100] sm:$0xff]
    %v75 = vld [vmem:[#allocation2 + $0x108] sm:$0xff]
    %v76 = vld [vmem:[#allocation2 + $0x110] sm:$0xff]
    %v77 = vld [vmem:[#allocation2 + $0x118] sm:$0xff]
    %v78 = vld [vmem:[#allocation2 + $0x120] sm:$0xff]
    %v79 = vld [vmem:[#allocation2 + $0x128] sm:$0xff]
    %v80 = vld [vmem:[#allocation2 + $0x130] sm:$0xff]
    %v81 = vld [vmem:[#allocation2 + $0x138] sm:$0xff]
    %v82 = vld [vmem:[#allocation2 + $0x140] sm:$0xff]
    %v83 = vld [vmem:[#allocation2 + $0x148] sm:$0xff]
    %v84 = vld [vmem:[#allocation2 + $0x150] sm:$0xff]
    %v85 = vld [vmem:[#allocation2 + $0x158] sm:$0xff]
    %v86 = vld [vmem:[#allocation2 + $0x160] sm:$0xff]
    %v87 = vld [vmem:[#allocation2 + $0x168] sm:$0xff]
    %v88 = vld [vmem:[#allocation2 + $0x170] sm:$0xff]
    %v89 = vld [vmem:[#allocation2 + $0x178] sm:$0xff]
    %v90 = vld [vmem:[#allocation2 + $0x180] sm:$0xff]
    %v91 = vld [vmem:[#allocation2 + $0x188] sm:$0xff]
    %v92 = vld [vmem:[#allocation2 + $0x190] sm:$0xff]
    %v93 = vld [vmem:[#allocation2 + $0x198] sm:$0xff]
    %v94 = vld [vmem:[#allocation2 + $0x1a0] sm:$0xff]
    %v95 = vld [vmem:[#allocation2 + $0x1a8] sm:$0xff]
    %v96 = vld [vmem:[#allocation2 + $0x1b0] sm:$0xff]
    %v97 = vld [vmem:[#allocation2 + $0x1b8] sm:$0xff]
    %v98 = vld [vmem:[#allocation2 + $0x1c0] sm:$0xff]
    %v99 = vld [vmem:[#allocation2 + $0x1c8] sm:$0xff]
    %v100 = vld [vmem:[#allocation2 + $0x1d0] sm:$0xff]
    %v101 = vld [vmem:[#allocation2 + $0x1d8] sm:$0xff]
    %v102 = vld [vmem:[#allocation2 + $0x1e0] sm:$0xff]
    %v103 = vld [vmem:[#allocation2 + $0x1e8] sm:$0xff]
    %v104 = vld [vmem:[#allocation2 + $0x1f0] sm:$0xff]
    %v105 = vld [vmem:[#allocation2 + $0x1f8] sm:$0xff]
    %v106 = vld [vmem:[#allocation2 + $0x200] sm:$0xff]
    %v107 = vld [vmem:[#allocation2 + $0x208] sm:$0xff]
    %v108 = vld [vmem:[#allocation2 + $0x210] sm:$0xff]
    %v109 = vld [vmem:[#allocation2 + $0x218] sm:$0xff]
    %v110 = vld [vmem:[#allocation2 + $0x220] sm:$0xff]
    %v111 = vld [vmem:[#allocation2 + $0x228] sm:$0xff]
    %v112 = vld [vmem:[#allocation2 + $0x230] sm:$0xff]
    %v113 = vld [vmem:[#allocation2 + $0x238] sm:$0xff]
    %v114 = vld [vmem:[#allocation2 + $0x240] sm:$0xff]
    %v115 = vld [vmem:[#allocation2 + $0x248] sm:$0xff]
    %v116 = vld [vmem:[#allocation2 + $0x250] sm:$0xff]
    %v117 = vld [vmem:[#allocation2 + $0x258] sm:$0xff]
    %v118 = vld [vmem:[#allocation2 + $0x260] sm:$0xff]
    %v119 = vld [vmem:[#allocation2 + $0x268] sm:$0xff]
    %v120 = vld [vmem:[#allocation2 + $0x270] sm:$0xff]
    %v121 = vld [vmem:[#allocation2 + $0x278] sm:$0xff]
    %v122 = vld [vmem:[#allocation2 + $0x280] sm:$0xff]
    %v123 = vld [vmem:[#allocation2 + $0x288] sm:$0xff]
    %v124 = vld [vmem:[#allocation2 + $0x290] sm:$0xff]
    %v125 = vld [vmem:[#allocation2 + $0x298] sm:$0xff]
    %v126 = vld [vmem:[#allocation2 + $0x2a0] sm:$0xff]
    %v127 = vld [vmem:[#allocation2 + $0x2a8] sm:$0xff]
    %v128 = vld [vmem:[#allocation2 + $0x2b0] sm:$0xff]
    %v129 = vld [vmem:[#allocation2 + $0x2b8] sm:$0xff]
    %v130 = vld [vmem:[#allocation2 + $0x2c0] sm:$0xff]
    %v131 = vld [vmem:[#allocation2 + $0x2c8] sm:$0xff]
    %v132 = vld [vmem:[#allocation2 + $0x2d0] sm:$0xff]
    %v133 = vld [vmem:[#allocation2 + $0x2d8] sm:$0xff]
    %v134 = vld [vmem:[#allocation2 + $0x2e0] sm:$0xff]
    %v135 = vld [vmem:[#allocation2 + $0x2e8] sm:$0xff]
    %v136 = vld [vmem:[#allocation2 + $0x2f0] sm:$0xff]
    %v137 = vld [vmem:[#allocation2 + $0x2f8] sm:$0xff]
    %v138 = vld [vmem:[#allocation2 + $0x300] sm:$0xff]
    %v139 = vld [vmem:[#allocation2 + $0x308] sm:$0xff]
    %v140 = vld [vmem:[#allocation2 + $0x310] sm:$0xff]
    %v141 = vld [vmem:[#allocation2 + $0x318] sm:$0xff]
    %v142 = vld [vmem:[#allocation2 + $0x320] sm:$0xff]
    %v143 = vld [vmem:[#allocation2 + $0x328] sm:$0xff]
    %v144 = vld [vmem:[#allocation2 + $0x330] sm:$0xff]
    %v145 = vld [vmem:[#allocation2 + $0x338] sm:$0xff]
    %v146 = vld [vmem:[#allocation2 + $0x340] sm:$0xff]
    %v147 = vld [vmem:[#allocation2 + $0x348] sm:$0xff]
    %v148 = vld [vmem:[#allocation2 + $0x350] sm:$0xff]
    %v149 = vld [vmem:[#allocation2 + $0x358] sm:$0xff]
    %v150 = vld [vmem:[#allocation2 + $0x360] sm:$0xff]
    %v151 = vld [vmem:[#allocation2 + $0x368] sm:$0xff]
    %v152 = vld [vmem:[#allocation2 + $0x370] sm:$0xff]
    %v153 = vld [vmem:[#allocation2 + $0x378] sm:$0xff]
    %v154 = vld [vmem:[#allocation2 + $0x380] sm:$0xff]
    %v155 = vld [vmem:[#allocation2 + $0x388] sm:$0xff]
    %v156 = vld [vmem:[#allocation2 + $0x390] sm:$0xff]
    %v157 = vld [vmem:[#allocation2 + $0x398] sm:$0xff]
    %v158 = vld [vmem:[#allocation2 + $0x3a0] sm:$0xff]
    %v159 = vld [vmem:[#allocation2 + $0x3a8] sm:$0xff]
    %v160 = vld [vmem:[#allocation2 + $0x3b0] sm:$0xff]
    %v161 = vld [vmem:[#allocation2 + $0x3b8] sm:$0xff]
    %v162 = vld [vmem:[#allocation2 + $0x3c0] sm:$0xff]
    %v163 = vld [vmem:[#allocation2 + $0x3c8] sm:$0xff]
    %v164 = vld [vmem:[#allocation2 + $0x3d0] sm:$0xff]
    %v165 = vld [vmem:[#allocation2 + $0x3d8] sm:$0xff]
    %v166 = vld [vmem:[#allocation2 + $0x3e0] sm:$0xff]
    %v167 = vld [vmem:[#allocation2 + $0x3e8] sm:$0xff]
    %v168 = vld [vmem:[#allocation2 + $0x3f0] sm:$0xff]
    %v169 = vld [vmem:[#allocation2 + $0x3f8] sm:$0xff]
    %v170 = vld [vmem:[%s2] sm:$0x1]
    %v172 = vlaneseq
    %v173 = vshrl.u32 %v172, 7
    %v174 = vsub.s32 0, %v173
    %v175 = vrot.slane %v170, %v174
    %177 = vmatprep.subr.mxu0 0.0
    %178 = vmatpush1.msra.mxu0 %v57
    %179 = vmatprep.subr.mxu0 0.0
    %180 = vmatpush1.msra.mxu0 %v56
    %181 = vmatprep.subr.mxu0 0.0
    %182 = vmatpush1.msra.mxu0 %v55
    %183 = vmatprep.subr.mxu0 0.0
    %184 = vmatpush1.msra.mxu0 %v54
    %185 = vmatprep.subr.mxu0 0.0
    %186 = vmatpush1.msra.mxu0 %v53
    %187 = vmatprep.subr.mxu0 0.0
    %188 = vmatpush1.msra.mxu0 %v52
    %189 = vmatprep.subr.mxu0 0.0
    %190 = vmatpush1.msra.mxu0 %v51
    %191 = vmatprep.subr.mxu0 0.0
    %192 = vmatpush1.msra.mxu0 %v50
    %193 = vmatprep.subr.mxu0 0.0
    %194 = vmatpush1.msra.mxu0 %v49
    %195 = vmatprep.subr.mxu0 0.0
    %196 = vmatpush1.msra.mxu0 %v48
    %197 = vmatprep.subr.mxu0 0.0
    %198 = vmatpush1.msra.mxu0 %v47
    %199 = vmatprep.subr.mxu0 0.0
    %200 = vmatpush1.msra.mxu0 %v46
    %201 = vmatprep.subr.mxu0 0.0
    %202 = vmatpush1.msra.mxu0 %v45
    %203 = vmatprep.subr.mxu0 0.0
    %204 = vmatpush1.msra.mxu0 %v44
    %205 = vmatprep.subr.mxu0 0.0
    %206 = vmatpush1.msra.mxu0 %v43
    %207 = vmatprep.subr.mxu0 0.0
    %208 = vmatpush1.msra.mxu0 %v42
    %209 = vmatprep.subr.mxu0 0.0
    %210 = vmatpush2.msra.mxu0 %v73
    %211 = vmatprep.subr.mxu0 0.0
    %212 = vmatpush2.msra.mxu0 %v72
    %213 = vmatprep.subr.mxu0 0.0
    %214 = vmatpush2.msra.mxu0 %v71
    %215 = vmatprep.subr.mxu0 0.0
    %216 = vmatpush2.msra.mxu0 %v70
    %217 = vmatprep.subr.mxu0 0.0
    %218 = vmatpush2.msra.mxu0 %v69
    %219 = vmatprep.subr.mxu0 0.0
    %220 = vmatpush2.msra.mxu0 %v68
    %221 = vmatprep.subr.mxu0 0.0
    %222 = vmatpush2.msra.mxu0 %v67
    %223 = vmatprep.subr.mxu0 0.0
    %224 = vmatpush2.msra.mxu0 %v66
    %225 = vmatprep.subr.mxu0 0.0
    %226 = vmatpush2.msra.mxu0 %v65
    %227 = vmatprep.subr.mxu0 0.0
    %228 = vmatpush2.msra.mxu0 %v64
    %229 = vmatprep.subr.mxu0 0.0
    %230 = vmatpush2.msra.mxu0 %v63
    %231 = vmatprep.subr.mxu0 0.0
    %232 = vmatpush2.msra.mxu0 %v62
    %233 = vmatprep.subr.mxu0 0.0
    %234 = vmatpush2.msra.mxu0 %v61
    %235 = vmatprep.subr.mxu0 0.0
    %236 = vmatpush2.msra.mxu0 %v60
    %237 = vmatprep.subr.mxu0 0.0
    %238 = vmatpush2.msra.mxu0 %v59
    %239 = vmatprep.subr.mxu0 0.0
    %240 = vmatpush2.msra.mxu0 %v58
    %241 = vmatprep.mubr.f32.mxu0 %v35
    %242 = vmatmul.mubr.f32.gmra.mxu0 %v34
    %v243 = vpop.f32.mrf.mxu0
    %v244 = vadd.f32 %v175, %v243
    %v245 = vpop.f32.mrf.mxu0
    %246 = vdwg.mxu0
    %247 = vmatprep.subr.mxu0 0.0
    %248 = vmatpush1.msra.mxu0 %v89
    %249 = vmatprep.subr.mxu0 0.0
    %250 = vmatpush1.msra.mxu0 %v88
    %251 = vmatprep.subr.mxu0 0.0
    %252 = vmatpush1.msra.mxu0 %v87
    %253 = vmatprep.subr.mxu0 0.0
    %254 = vmatpush1.msra.mxu0 %v86
    %255 = vmatprep.subr.mxu0 0.0
    %256 = vmatpush1.msra.mxu0 %v85
    %257 = vmatprep.subr.mxu0 0.0
    %258 = vmatpush1.msra.mxu0 %v84
    %259 = vmatprep.subr.mxu0 0.0
    %260 = vmatpush1.msra.mxu0 %v83
    %261 = vmatprep.subr.mxu0 0.0
    %262 = vmatpush1.msra.mxu0 %v82
    %263 = vmatprep.subr.mxu0 0.0
    %264 = vmatpush1.msra.mxu0 %v81
    %265 = vmatprep.subr.mxu0 0.0
    %266 = vmatpush1.msra.mxu0 %v80
    %267 = vmatprep.subr.mxu0 0.0
    %268 = vmatpush1.msra.mxu0 %v79
    %269 = vmatprep.subr.mxu0 0.0
    %270 = vmatpush1.msra.mxu0 %v78
    %271 = vmatprep.subr.mxu0 0.0
    %272 = vmatpush1.msra.mxu0 %v77
    %273 = vmatprep.subr.mxu0 0.0
    %274 = vmatpush1.msra.mxu0 %v76
    %275 = vmatprep.subr.mxu0 0.0
    %276 = vmatpush1.msra.mxu0 %v75
    %277 = vmatprep.subr.mxu0 0.0
    %278 = vmatpush1.msra.mxu0 %v74
    %279 = vmatprep.subr.mxu0 0.0
    %280 = vmatpush2.msra.mxu0 %v105
    %281 = vmatprep.subr.mxu0 0.0
    %282 = vmatpush2.msra.mxu0 %v104
    %283 = vmatprep.subr.mxu0 0.0
    %284 = vmatpush2.msra.mxu0 %v103
    %285 = vmatprep.subr.mxu0 0.0
    %286 = vmatpush2.msra.mxu0 %v102
    %287 = vmatprep.subr.mxu0 0.0
    %288 = vmatpush2.msra.mxu0 %v101
    %289 = vmatprep.subr.mxu0 0.0
    %290 = vmatpush2.msra.mxu0 %v100
    %291 = vmatprep.subr.mxu0 0.0
    %292 = vmatpush2.msra.mxu0 %v99
    %293 = vmatprep.subr.mxu0 0.0
    %294 = vmatpush2.msra.mxu0 %v98
    %295 = vmatprep.subr.mxu0 0.0
    %296 = vmatpush2.msra.mxu0 %v97
    %297 = vmatprep.subr.mxu0 0.0
    %298 = vmatpush2.msra.mxu0 %v96
    %299 = vmatprep.subr.mxu0 0.0
    %300 = vmatpush2.msra.mxu0 %v95
    %301 = vmatprep.subr.mxu0 0.0
    %302 = vmatpush2.msra.mxu0 %v94
    %303 = vmatprep.subr.mxu0 0.0
    %304 = vmatpush2.msra.mxu0 %v93
    %305 = vmatprep.subr.mxu0 0.0
    %306 = vmatpush2.msra.mxu0 %v92
    %307 = vmatprep.subr.mxu0 0.0
    %308 = vmatpush2.msra.mxu0 %v91
    %309 = vmatprep.subr.mxu0 0.0
    %310 = vmatpush2.msra.mxu0 %v90
    %311 = vmatprep.mubr.f32.mxu0 %v37
    %312 = vmatmul.mubr.f32.gmra.mxu0 %v36
    %v313 = vpop.f32.mrf.mxu0
    %v314 = vadd.f32 %v244, %v313
    %v315 = vpop.f32.mrf.mxu0
    %316 = vdwg.mxu0
    %317 = vmatprep.subr.mxu0 0.0
    %318 = vmatpush1.msra.mxu0 %v121
    %319 = vmatprep.subr.mxu0 0.0
    %320 = vmatpush1.msra.mxu0 %v120
    %321 = vmatprep.subr.mxu0 0.0
    %322 = vmatpush1.msra.mxu0 %v119
    %323 = vmatprep.subr.mxu0 0.0
    %324 = vmatpush1.msra.mxu0 %v118
    %325 = vmatprep.subr.mxu0 0.0
    %326 = vmatpush1.msra.mxu0 %v117
    %327 = vmatprep.subr.mxu0 0.0
    %328 = vmatpush1.msra.mxu0 %v116
    %329 = vmatprep.subr.mxu0 0.0
    %330 = vmatpush1.msra.mxu0 %v115
    %331 = vmatprep.subr.mxu0 0.0
    %332 = vmatpush1.msra.mxu0 %v114
    %333 = vmatprep.subr.mxu0 0.0
    %334 = vmatpush1.msra.mxu0 %v113
    %335 = vmatprep.subr.mxu0 0.0
    %336 = vmatpush1.msra.mxu0 %v112
    %337 = vmatprep.subr.mxu0 0.0
    %338 = vmatpush1.msra.mxu0 %v111
    %339 = vmatprep.subr.mxu0 0.0
    %340 = vmatpush1.msra.mxu0 %v110
    %341 = vmatprep.subr.mxu0 0.0
    %342 = vmatpush1.msra.mxu0 %v109
    %343 = vmatprep.subr.mxu0 0.0
    %344 = vmatpush1.msra.mxu0 %v108
    %345 = vmatprep.subr.mxu0 0.0
    %346 = vmatpush1.msra.mxu0 %v107
    %347 = vmatprep.subr.mxu0 0.0
    %348 = vmatpush1.msra.mxu0 %v106
    %349 = vmatprep.subr.mxu0 0.0
    %350 = vmatpush2.msra.mxu0 %v137
    %351 = vmatprep.subr.mxu0 0.0
    %352 = vmatpush2.msra.mxu0 %v136
    %353 = vmatprep.subr.mxu0 0.0
    %354 = vmatpush2.msra.mxu0 %v135
    %355 = vmatprep.subr.mxu0 0.0
    %356 = vmatpush2.msra.mxu0 %v134
    %357 = vmatprep.subr.mxu0 0.0
    %358 = vmatpush2.msra.mxu0 %v133
    %359 = vmatprep.subr.mxu0 0.0
    %360 = vmatpush2.msra.mxu0 %v132
    %361 = vmatprep.subr.mxu0 0.0
    %362 = vmatpush2.msra.mxu0 %v131
    %363 = vmatprep.subr.mxu0 0.0
    %364 = vmatpush2.msra.mxu0 %v130
    %365 = vmatprep.subr.mxu0 0.0
    %366 = vmatpush2.msra.mxu0 %v129
    %367 = vmatprep.subr.mxu0 0.0
    %368 = vmatpush2.msra.mxu0 %v128
    %369 = vmatprep.subr.mxu0 0.0
    %370 = vmatpush2.msra.mxu0 %v127
    %371 = vmatprep.subr.mxu0 0.0
    %372 = vmatpush2.msra.mxu0 %v126
    %373 = vmatprep.subr.mxu0 0.0
    %374 = vmatpush2.msra.mxu0 %v125
    %375 = vmatprep.subr.mxu0 0.0
    %376 = vmatpush2.msra.mxu0 %v124
    %377 = vmatprep.subr.mxu0 0.0
    %378 = vmatpush2.msra.mxu0 %v123
    %379 = vmatprep.subr.mxu0 0.0
    %380 = vmatpush2.msra.mxu0 %v122
    %381 = vmatprep.mubr.f32.mxu0 %v39
    %382 = vmatmul.mubr.f32.gmra.mxu0 %v38
    %v383 = vpop.f32.mrf.mxu0
    %v384 = vadd.f32 %v314, %v383
    %v385 = vpop.f32.mrf.mxu0
    %386 = vdwg.mxu0
    %387 = vmatprep.subr.mxu0 0.0
    %388 = vmatpush1.msra.mxu0 %v153
    %389 = vmatprep.subr.mxu0 0.0
    %390 = vmatpush1.msra.mxu0 %v152
    %391 = vmatprep.subr.mxu0 0.0
    %392 = vmatpush1.msra.mxu0 %v151
    %393 = vmatprep.subr.mxu0 0.0
    %394 = vmatpush1.msra.mxu0 %v150
    %395 = vmatprep.subr.mxu0 0.0
    %396 = vmatpush1.msra.mxu0 %v149
    %397 = vmatprep.subr.mxu0 0.0
    %398 = vmatpush1.msra.mxu0 %v148
    %399 = vmatprep.subr.mxu0 0.0
    %400 = vmatpush1.msra.mxu0 %v147
    %401 = vmatprep.subr.mxu0 0.0
    %402 = vmatpush1.msra.mxu0 %v146
    %403 = vmatprep.subr.mxu0 0.0
    %404 = vmatpush1.msra.mxu0 %v145
    %405 = vmatprep.subr.mxu0 0.0
    %406 = vmatpush1.msra.mxu0 %v144
    %407 = vmatprep.subr.mxu0 0.0
    %408 = vmatpush1.msra.mxu0 %v143
    %409 = vmatprep.subr.mxu0 0.0
    %410 = vmatpush1.msra.mxu0 %v142
    %411 = vmatprep.subr.mxu0 0.0
    %412 = vmatpush1.msra.mxu0 %v141
    %413 = vmatprep.subr.mxu0 0.0
    %414 = vmatpush1.msra.mxu0 %v140
    %415 = vmatprep.subr.mxu0 0.0
    %416 = vmatpush1.msra.mxu0 %v139
    %417 = vmatprep.subr.mxu0 0.0
    %418 = vmatpush1.msra.mxu0 %v138
    %419 = vmatprep.subr.mxu0 0.0
    %420 = vmatpush2.msra.mxu0 %v169
    %421 = vmatprep.subr.mxu0 0.0
    %422 = vmatpush2.msra.mxu0 %v168
    %423 = vmatprep.subr.mxu0 0.0
    %424 = vmatpush2.msra.mxu0 %v167
    %425 = vmatprep.subr.mxu0 0.0
    %426 = vmatpush2.msra.mxu0 %v166
    %427 = vmatprep.subr.mxu0 0.0
    %428 = vmatpush2.msra.mxu0 %v165
    %429 = vmatprep.subr.mxu0 0.0
    %430 = vmatpush2.msra.mxu0 %v164
    %431 = vmatprep.subr.mxu0 0.0
    %432 = vmatpush2.msra.mxu0 %v163
    %433 = vmatprep.subr.mxu0 0.0
    %434 = vmatpush2.msra.mxu0 %v162
    %435 = vmatprep.subr.mxu0 0.0
    %436 = vmatpush2.msra.mxu0 %v161
    %437 = vmatprep.subr.mxu0 0.0
    %438 = vmatpush2.msra.mxu0 %v160
    %439 = vmatprep.subr.mxu0 0.0
    %440 = vmatpush2.msra.mxu0 %v159
    %441 = vmatprep.subr.mxu0 0.0
    %442 = vmatpush2.msra.mxu0 %v158
    %443 = vmatprep.subr.mxu0 0.0
    %444 = vmatpush2.msra.mxu0 %v157
    %445 = vmatprep.subr.mxu0 0.0
    %446 = vmatpush2.msra.mxu0 %v156
    %447 = vmatprep.subr.mxu0 0.0
    %448 = vmatpush2.msra.mxu0 %v155
    %449 = vmatprep.subr.mxu0 0.0
    %450 = vmatpush2.msra.mxu0 %v154
    %451 = vmatprep.mubr.f32.mxu0 %v41
    %452 = vmatmul.mubr.f32.gmra.mxu0 %v40
    %v453 = vpop.f32.mrf.mxu0
    %v454 = vadd.f32 %v384, %v453
    %v455 = vpop.f32.mrf.mxu0
    %456 = vdwg.mxu0
    %v457 = vmax.f32 %v454, 0.0
    %v458 = vld [vmem:[%s3] sm:$0xff]
    %v459 = vld [vmem:[%s3 + $0x8] sm:$0xff]
    %v460 = vld [vmem:[%s3 + $0x10] sm:$0xff]
    %v461 = vld [vmem:[%s3 + $0x18] sm:$0xff]
    %v462 = vld [vmem:[%s3 + $0x20] sm:$0xff]
    %v463 = vld [vmem:[%s3 + $0x28] sm:$0xff]
    %v464 = vld [vmem:[%s3 + $0x30] sm:$0xff]
    %v465 = vld [vmem:[%s3 + $0x38] sm:$0xff]
    %v466 = vld [vmem:[%s3 + $0x40] sm:$0xff]
    %v467 = vld [vmem:[%s3 + $0x48] sm:$0xff]
    %v468 = vld [vmem:[%s3 + $0x50] sm:$0xff]
    %v469 = vld [vmem:[%s3 + $0x58] sm:$0xff]
    %v470 = vld [vmem:[%s3 + $0x60] sm:$0xff]
    %v471 = vld [vmem:[%s3 + $0x68] sm:$0xff]
    %v472 = vld [vmem:[%s3 + $0x70] sm:$0xff]
    %v473 = vld [vmem:[%s3 + $0x78] sm:$0xff]
    %v474 = vld [vmem:[%s4] sm:$0x1]
    %v476 = vlaneseq
    %v477 = vshrl.u32 %v476, 7
    %v478 = vsub.s32 0, %v477
    %v479 = vrot.slane %v474, %v478
    %481 = vmatprep.subr.mxu0 0.0
    %482 = vmatpush1.msra.mxu0 %v473
    %483 = vmatprep.subr.mxu0 0.0
    %484 = vmatpush1.msra.mxu0 %v472
    %485 = vmatprep.subr.mxu0 0.0
    %486 = vmatpush1.msra.mxu0 %v471
    %487 = vmatprep.subr.mxu0 0.0
    %488 = vmatpush1.msra.mxu0 %v470
    %489 = vmatprep.subr.mxu0 0.0
    %490 = vmatpush1.msra.mxu0 %v469
    %491 = vmatprep.subr.mxu0 0.0
    %492 = vmatpush1.msra.mxu0 %v468
    %493 = vmatprep.subr.mxu0 0.0
    %494 = vmatpush1.msra.mxu0 %v467
    %495 = vmatprep.subr.mxu0 0.0
    %496 = vmatpush1.msra.mxu0 %v466
    %497 = vmatprep.subr.mxu0 0.0
    %498 = vmatpush1.msra.mxu0 %v465
    %499 = vmatprep.subr.mxu0 0.0
    %500 = vmatpush1.msra.mxu0 %v464
    %501 = vmatprep.subr.mxu0 0.0
    %502 = vmatpush1.msra.mxu0 %v463
    %503 = vmatprep.subr.mxu0 0.0
    %504 = vmatpush1.msra.mxu0 %v462
    %505 = vmatprep.subr.mxu0 0.0
    %506 = vmatpush1.msra.mxu0 %v461
    %507 = vmatprep.subr.mxu0 0.0
    %508 = vmatpush1.msra.mxu0 %v460
    %509 = vmatprep.subr.mxu0 0.0
    %510 = vmatpush1.msra.mxu0 %v459
    %511 = vmatprep.subr.mxu0 0.0
    %512 = vmatpush1.msra.mxu0 %v458
    %513 = vmatprep.subr.mxu0 0.0
    %514 = vmatpush2.msra.mxu0 0.0
    %515 = vmatprep.subr.mxu0 0.0
    %516 = vmatpush2.msra.mxu0 0.0
    %517 = vmatprep.subr.mxu0 0.0
    %518 = vmatpush2.msra.mxu0 0.0
    %519 = vmatprep.subr.mxu0 0.0
    %520 = vmatpush2.msra.mxu0 0.0
    %521 = vmatprep.subr.mxu0 0.0
    %522 = vmatpush2.msra.mxu0 0.0
    %523 = vmatprep.subr.mxu0 0.0
    %524 = vmatpush2.msra.mxu0 0.0
    %525 = vmatprep.subr.mxu0 0.0
    %526 = vmatpush2.msra.mxu0 0.0
    %527 = vmatprep.subr.mxu0 0.0
    %528 = vmatpush2.msra.mxu0 0.0
    %529 = vmatprep.subr.mxu0 0.0
    %530 = vmatpush2.msra.mxu0 0.0
    %531 = vmatprep.subr.mxu0 0.0
    %532 = vmatpush2.msra.mxu0 0.0
    %533 = vmatprep.subr.mxu0 0.0
    %534 = vmatpush2.msra.mxu0 0.0
    %535 = vmatprep.subr.mxu0 0.0
    %536 = vmatpush2.msra.mxu0 0.0
    %537 = vmatprep.subr.mxu0 0.0
    %538 = vmatpush2.msra.mxu0 0.0
    %539 = vmatprep.subr.mxu0 0.0
    %540 = vmatpush2.msra.mxu0 0.0
    %541 = vmatprep.subr.mxu0 0.0
    %542 = vmatpush2.msra.mxu0 0.0
    %543 = vmatprep.subr.mxu0 0.0
    %544 = vmatpush2.msra.mxu0 0.0
    %545 = vmatprep.mubr.f32.mxu0 0.0
    %546 = vmatmul.mubr.f32.gmra.mxu0 %v457
    %v547 = vpop.f32.mrf.mxu0
    %v548 = vadd.f32 %v479, %v547
    %v549 = vpop.f32.mrf.mxu0
    %550 = vdwg.mxu0
    %551 = vst [vmem:[%s5] sm:$0xff] %v548
    // Predicated region
    $region26: #{siamese_forward.1} parent=1 // pred_check
      _
    $region27: #{siamese_forward.1} parent=1 // pred_check_branch
      %553 = sbr.rel (0) target = $region29
    $region28: #{siamese_forward.1} parent=1 // pred_region
      _
    $region29: #{siamese_forward.1} parent=1 // pred_fallthru
      _
    // Predicated region
    $region30: #{siamese_forward.1} parent=1 // pred_check
      _
    $region31: #{siamese_forward.1} parent=1 // pred_check_branch
      %555 = sbr.rel (0) target = $region33
    $region32: #{siamese_forward.1} parent=1 // pred_region
      _
    $region33: #{siamese_forward.1} parent=1 // pred_fallthru
      _
    %556 = vsyncpa [#allocation3], 1

</llo_original>
